<compile_context>
chip_gen: v7x
topology: tpu7x:2x2x1
jax: 0.10.0
libtpu: 0.0.40
codegen_flags: <defaults>
</compile_context>

<pallas_src>
import functools

import numpy as np
import jax
import jax.numpy as jnp
from jax.experimental import pallas as pl
from jax.experimental.pallas import tpu as pltpu


def _round_up(x, m):
    return ((x + m - 1) // m) * m


def _enumerate_terms(latent_dim, poly_order, include_sine):
    """Library terms in the same order as sindy_library_torch."""
    terms = [([], None)]                               # constant 1
    for i in range(latent_dim):                        # linear
        terms.append(([i], None))
    if poly_order > 1:
        for i in range(latent_dim):
            for j in range(i, latent_dim):
                terms.append(([i, j], None))
    if poly_order > 2:
        for i in range(latent_dim):
            for j in range(i, latent_dim):
                for k in range(j, latent_dim):
                    terms.append(([i, j, k], None))
    if poly_order > 3:
        for i in range(latent_dim):
            for j in range(i, latent_dim):
                for k in range(j, latent_dim):
                    for q in range(k, latent_dim):
                        terms.append(([i, j, k, q], None))
    if poly_order > 4:
        for i in range(latent_dim):
            for j in range(i, latent_dim):
                for k in range(j, latent_dim):
                    for q in range(k, latent_dim):
                        for r in range(q, latent_dim):
                            terms.append(([i, j, k, q, r], None))
    if include_sine:
        for i in range(latent_dim):
            terms.append(([], i))
    return terms


def build_library_plan(latent_dim, poly_order, include_sine):
    """Encode the library as selection matrices so the kernel builds Theta with
    poly_order tiny matmuls (plus one optional sine matmul).

    The kernel's RHS operand is the augmented input
        h_aug = [h_0..h_{D-1} ; ones ; zeros]   shape (D+2, batch_tile)
    Polynomial slot s of term t selects a row of h_aug (unused slots select the
    ones row).  Sine terms select the zeros row in slot 0 (so their polynomial
    product is 0) and get sin(h_i) added via `sinsel`.
    """
    terms = _enumerate_terms(latent_dim, poly_order, include_sine)
    L = len(terms)
    P = poly_order
    D = latent_dim
    Daug = D + 2                                   # rows: h..., ones, zeros

    sel = np.zeros((P, L, Daug), np.float32)
    sinsel = np.zeros((L, D), np.float32)

    for t, (factors, sine_idx) in enumerate(terms):
        if sine_idx is not None:
            sinsel[t, sine_idx] = 1.0
            sel[0, t, D + 1] = 1.0                 # zeros row -> product 0
            for s in range(1, P):
                sel[s, t, D] = 1.0                 # ones row
        else:
            for s in range(P):
                if s < len(factors):
                    sel[s, t, factors[s]] = 1.0
                else:
                    sel[s, t, D] = 1.0             # ones row

    return jnp.asarray(sel), jnp.asarray(sinsel), L


def sindy_kernel(dt_ref, h_ref, sel_ref, coeff_ref, *rest,
                 poly_order, latent_dim, include_sine):
    if include_sine:
        sinsel_ref, out_ref = rest
    else:
        (out_ref,) = rest

    h_aug = h_ref[...]                                        # (D+2, TB) f32
    h = h_aug[:latent_dim, :]                                 # (D, TB)

    # Theta (L, TB): product over poly_order selection factors (static unroll).
    theta = None
    for s in range(poly_order):
        f = jnp.dot(sel_ref[s], h_aug,
                    preferred_element_type=jnp.float32)       # (L, TB)
        theta = f if theta is None else theta * f

    if include_sine:
        theta = theta + jnp.dot(sinsel_ref[...], jnp.sin(h),
                                preferred_element_type=jnp.float32)

    # dh = (coefficients * mask)^T @ Theta ; out = h + dh * dt
    dh = jnp.dot(coeff_ref[...], theta,
                 preferred_element_type=jnp.float32)          # (D, TB)
    out_ref[...] = h + dh * dt_ref[0, 0]


def sindy_forward(h, dt, coefficients, coefficient_mask, *,
                  latent_dim, poly_order, include_sine, tb=2048):
    assert 1 <= poly_order <= 5
    sel, sinsel, L = build_library_plan(latent_dim, poly_order, include_sine)
    B, D = h.shape
    assert D == latent_dim
    assert coefficients.shape == (L, D)
    P, _, Daug = sel.shape

    # Batch-on-lanes layout, padded to a lane-aligned tile.
    Bp = _round_up(B, 128)
    tb = min(max(128, _round_up(tb, 128)), Bp)
    Bp = _round_up(Bp, tb)
    grid = Bp // tb

    h32 = jnp.asarray(h, jnp.float32)
    hT = jnp.zeros((D, Bp), jnp.float32).at[:, :B].set(h32.T)
    h_aug = jnp.concatenate(
        [hT, jnp.ones((1, Bp), jnp.float32), jnp.zeros((1, Bp), jnp.float32)],
        axis=0)                                               # (D+2, Bp)

    coeffT = (jnp.asarray(coefficients, jnp.float32)
              * jnp.asarray(coefficient_mask, jnp.float32)).T  # (D, L)
    dt_arr = jnp.asarray(dt, jnp.float32).reshape(1, 1)

    kernel = functools.partial(sindy_kernel, poly_order=poly_order,
                               latent_dim=latent_dim, include_sine=include_sine)

    in_specs = [
        pl.BlockSpec((1, 1), lambda i: (0, 0),
                     memory_space=pltpu.MemorySpace.SMEM),     # dt scalar
        pl.BlockSpec((Daug, tb), lambda i: (0, i)),            # h tile (lanes=batch)
        pl.BlockSpec((P, L, Daug), lambda i: (0, 0, 0)),       # selection (invariant)
        pl.BlockSpec((D, L), lambda i: (0, 0)),                # coeffT (invariant)
    ]
    operands = [dt_arr, h_aug, sel, coeffT]
    if include_sine:
        in_specs.append(pl.BlockSpec((L, D), lambda i: (0, 0)))  # sine selection
        operands.append(sinsel)

    outT = pl.pallas_call(
        kernel,
        out_shape=jax.ShapeDtypeStruct((D, Bp), jnp.float32),
        grid=(grid,),
        in_specs=in_specs,
        out_specs=pl.BlockSpec((D, tb), lambda i: (0, i)),
        compiler_params=pltpu.CompilerParams(
            dimension_semantics=("parallel",)),
    )(*operands)

    return outT[:, :B].T                                       # back to (B, D)


# ---------------- pure-numpy reference (mirrors sindy_library_torch) ---------
def sindy_library_ref(z, latent_dim, poly_order, include_sine):
    cols = [np.ones(z.shape[0], dtype=np.float64)]
    for i in range(latent_dim):
        cols.append(z[:, i])
    if poly_order > 1:
        for i in range(latent_dim):
            for j in range(i, latent_dim):
                cols.append(z[:, i] * z[:, j])
    if poly_order > 2:
        for i in range(latent_dim):
            for j in range(i, latent_dim):
                for k in range(j, latent_dim):
                    cols.append(z[:, i] * z[:, j] * z[:, k])
    if poly_order > 3:
        for i in range(latent_dim):
            for j in range(i, latent_dim):
                for k in range(j, latent_dim):
                    for q in range(k, latent_dim):
                        cols.append(z[:, i] * z[:, j] * z[:, k] * z[:, q])
    if poly_order > 4:
        for i in range(latent_dim):
            for j in range(i, latent_dim):
                for k in range(j, latent_dim):
                    for q in range(k, latent_dim):
                        for r in range(q, latent_dim):
                            cols.append(z[:, i] * z[:, j] * z[:, k]
                                        * z[:, q] * z[:, r])
    if include_sine:
        for i in range(latent_dim):
            cols.append(np.sin(z[:, i]))
    return np.stack(cols, axis=1)


def sindy_forward_ref(h, dt, coeff, mask, latent_dim, poly_order, include_sine):
    h64 = np.asarray(h, np.float64)
    theta = sindy_library_ref(h64, latent_dim, poly_order, include_sine)
    eff = np.asarray(coeff, np.float64) * np.asarray(mask, np.float64)
    return h64 + theta @ eff * dt


def _run_case(latent_dim, poly_order, include_sine, batch, dt, tb, mask_ones, key):
    terms = _enumerate_terms(latent_dim, poly_order, include_sine)
    library_dim = len(terms)
    kh, kc, km = jax.random.split(key, 3)
    h = jax.random.normal(kh, (batch, latent_dim), dtype=jnp.float32)
    # torch.nn.init.normal_(coefficients, mean=0.0, std=0.001)
    coefficients = 0.001 * jax.random.normal(
        kc, (library_dim, latent_dim), dtype=jnp.float32)
    if mask_ones:
        coefficient_mask = jnp.ones((library_dim, latent_dim), jnp.float32)
    else:
        coefficient_mask = (jax.random.uniform(
            km, (library_dim, latent_dim)) > 0.2).astype(jnp.float32)

    out = sindy_forward(h, dt, coefficients, coefficient_mask,
                        latent_dim=latent_dim, poly_order=poly_order,
                        include_sine=include_sine, tb=tb)
    out = jax.block_until_ready(out)

    ref = sindy_forward_ref(np.asarray(h), dt, np.asarray(coefficients),
                            np.asarray(coefficient_mask),
                            latent_dim, poly_order, include_sine)
    assert out.shape == (batch, latent_dim)
    np.testing.assert_allclose(np.asarray(out), ref, rtol=1e-5, atol=1e-6)
    return library_dim


if __name__ == "__main__":
    key = jax.random.PRNGKey(0)

    # Case 1: matches the module's synthetic config (library_dim = 23).
    L1 = _run_case(latent_dim=3, poly_order=3, include_sine=True,
                   batch=16, dt=0.01, tb=2048, mask_ones=True,
                   key=jax.random.fold_in(key, 1))
    assert L1 == 23, L1

    # Case 2: no sine path, non-multiple batch (exercises padding).
    _run_case(latent_dim=4, poly_order=2, include_sine=False,
              batch=10, dt=0.05, tb=2048, mask_ones=False,
              key=jax.random.fold_in(key, 2))

    # Case 3: multi-step grid (batch padded to 384, tb=128 -> 3 parallel steps).
    _run_case(latent_dim=3, poly_order=3, include_sine=True,
              batch=300, dt=0.02, tb=128, mask_ones=False,
              key=jax.random.fold_in(key, 3))

    print("KERNEL_OK")
</pallas_src>

<mosaic_0001>
module attributes {stable_mosaic.version = 11 : i64} {
  func.func @sindy_kernel(%arg0: i32, %arg1: memref<1x1xf32, #tpu.memory_space<smem>>, %arg2: memref<5x128xf32, #tpu.memory_space<vmem>>, %arg3: memref<3x23x5xf32, #tpu.memory_space<vmem>>, %arg4: memref<3x23xf32, #tpu.memory_space<vmem>>, %arg5: memref<23x3xf32, #tpu.memory_space<vmem>>, %arg6: memref<3x128xf32, #tpu.memory_space<vmem>>) attributes {dimension_semantics = [#tpu.dimension_semantics<parallel>], iteration_bounds = array<i64: 1>, scalar_prefetch = 0 : i64, scratch_operands = 0 : i64, tpu.core_type = #tpu.core_type<tc>, window_params = [{transform_indices = @transform_0, window_bounds = array<i64: 1, 1>}, {transform_indices = @transform_1, window_bounds = array<i64: 5, 128>}, {pipeline_mode = #tpu.pipeline_mode<synchronous>, transform_indices = @transform_2, window_bounds = array<i64: 3, 23, 5>}, {pipeline_mode = #tpu.pipeline_mode<synchronous>, transform_indices = @transform_3, window_bounds = array<i64: 3, 23>}, {pipeline_mode = #tpu.pipeline_mode<synchronous>, transform_indices = @transform_4, window_bounds = array<i64: 23, 3>}, {transform_indices = @transform_5, window_bounds = array<i64: 3, 128>}]} {
    %c0 = arith.constant 0 : index
    %c0_0 = arith.constant 0 : index
    %0 = vector.load %arg2[%c0, %c0_0] : memref<5x128xf32, #tpu.memory_space<vmem>>, vector<5x128xf32>
    %1 = vector.extract_strided_slice %0 {offsets = [0, 0], sizes = [3, 128], strides = [1, 1]} : vector<5x128xf32> to vector<3x128xf32>
    %c0_1 = arith.constant 0 : index
    %c0_2 = arith.constant 0 : index
    %c0_3 = arith.constant 0 : index
    %2 = vector.load %arg3[%c0_1, %c0_2, %c0_3] : memref<3x23x5xf32, #tpu.memory_space<vmem>>, vector<1x23x5xf32>
    %3 = vector.shape_cast %2 : vector<1x23x5xf32> to vector<23x5xf32>
    %cst = arith.constant dense<0.000000e+00> : vector<23x128xf32>
    %4 = tpu.matmul %3, %0, %cst {dimension_numbers = #tpu.dot_dimension_numbers<[1], [0], [0], [1], [0, 0, 1, 1], [], []>} : vector<23x5xf32>, vector<5x128xf32>, vector<23x128xf32> -> vector<23x128xf32>
    %c1 = arith.constant 1 : index
    %c0_4 = arith.constant 0 : index
    %c0_5 = arith.constant 0 : index
    %5 = vector.load %arg3[%c1, %c0_4, %c0_5] : memref<3x23x5xf32, #tpu.memory_space<vmem>>, vector<1x23x5xf32>
    %6 = vector.shape_cast %5 : vector<1x23x5xf32> to vector<23x5xf32>
    %cst_6 = arith.constant dense<0.000000e+00> : vector<23x128xf32>
    %7 = tpu.matmul %6, %0, %cst_6 {dimension_numbers = #tpu.dot_dimension_numbers<[1], [0], [0], [1], [0, 0, 1, 1], [], []>} : vector<23x5xf32>, vector<5x128xf32>, vector<23x128xf32> -> vector<23x128xf32>
    %8 = arith.mulf %4, %7 : vector<23x128xf32>
    %c2 = arith.constant 2 : index
    %c0_7 = arith.constant 0 : index
    %c0_8 = arith.constant 0 : index
    %9 = vector.load %arg3[%c2, %c0_7, %c0_8] : memref<3x23x5xf32, #tpu.memory_space<vmem>>, vector<1x23x5xf32>
    %10 = vector.shape_cast %9 : vector<1x23x5xf32> to vector<23x5xf32>
    %cst_9 = arith.constant dense<0.000000e+00> : vector<23x128xf32>
    %11 = tpu.matmul %10, %0, %cst_9 {dimension_numbers = #tpu.dot_dimension_numbers<[1], [0], [0], [1], [0, 0, 1, 1], [], []>} : vector<23x5xf32>, vector<5x128xf32>, vector<23x128xf32> -> vector<23x128xf32>
    %12 = arith.mulf %8, %11 : vector<23x128xf32>
    %c0_10 = arith.constant 0 : index
    %c0_11 = arith.constant 0 : index
    %13 = vector.load %arg5[%c0_10, %c0_11] : memref<23x3xf32, #tpu.memory_space<vmem>>, vector<23x3xf32>
    %14 = math.sin %1 : vector<3x128xf32>
    %cst_12 = arith.constant dense<0.000000e+00> : vector<23x128xf32>
    %15 = tpu.matmul %13, %14, %cst_12 {dimension_numbers = #tpu.dot_dimension_numbers<[1], [0], [0], [1], [0, 0, 1, 1], [], []>} : vector<23x3xf32>, vector<3x128xf32>, vector<23x128xf32> -> vector<23x128xf32>
    %16 = arith.addf %12, %15 : vector<23x128xf32>
    %c0_13 = arith.constant 0 : index
    %c0_14 = arith.constant 0 : index
    %17 = vector.load %arg4[%c0_13, %c0_14] : memref<3x23xf32, #tpu.memory_space<vmem>>, vector<3x23xf32>
    %cst_15 = arith.constant dense<0.000000e+00> : vector<3x128xf32>
    %18 = tpu.matmul %17, %16, %cst_15 {dimension_numbers = #tpu.dot_dimension_numbers<[1], [0], [0], [1], [0, 0, 1, 1], [], []>} : vector<3x23xf32>, vector<23x128xf32>, vector<3x128xf32> -> vector<3x128xf32>
    %c0_16 = arith.constant 0 : index
    %c0_17 = arith.constant 0 : index
    %19 = memref.load %arg1[%c0_16, %c0_17] : memref<1x1xf32, #tpu.memory_space<smem>>
    %20 = vector.broadcast %19 : f32 to vector<3x128xf32>
    %21 = arith.mulf %18, %20 : vector<3x128xf32>
    %22 = arith.addf %1, %21 : vector<3x128xf32>
    %c0_18 = arith.constant 0 : index
    %c0_19 = arith.constant 0 : index
    %23 = vector.load %arg6[%c0_18, %c0_19] : memref<3x128xf32, #tpu.memory_space<vmem>>, vector<3x128xf32>
    tpu.vector_store %arg6[%c0_18, %c0_19], %22 {strides = array<i32>} : memref<3x128xf32, #tpu.memory_space<vmem>>, vector<3x128xf32>,
    return
  }
  func.func @transform_0(%arg0: i32) -> (i32, i32) {
    %c0_i32 = arith.constant 0 : i32
    %c0_i32_0 = arith.constant 0 : i32
    %c0_i32_1 = arith.constant 0 : i32
    return %c0_i32, %c0_i32_0 : i32, i32
  }
  func.func @transform_1(%arg0: i32) -> (i32, i32) {
    %c0_i32 = arith.constant 0 : i32
    %c0_i32_0 = arith.constant 0 : i32
    return %c0_i32, %arg0 : i32, i32
  }
  func.func @transform_2(%arg0: i32) -> (i32, i32, i32) {
    %c0_i32 = arith.constant 0 : i32
    %c0_i32_0 = arith.constant 0 : i32
    %c0_i32_1 = arith.constant 0 : i32
    %c0_i32_2 = arith.constant 0 : i32
    return %c0_i32, %c0_i32_0, %c0_i32_1 : i32, i32, i32
  }
  func.func @transform_3(%arg0: i32) -> (i32, i32) {
    %c0_i32 = arith.constant 0 : i32
    %c0_i32_0 = arith.constant 0 : i32
    %c0_i32_1 = arith.constant 0 : i32
    return %c0_i32, %c0_i32_0 : i32, i32
  }
  func.func @transform_4(%arg0: i32) -> (i32, i32) {
    %c0_i32 = arith.constant 0 : i32
    %c0_i32_0 = arith.constant 0 : i32
    %c0_i32_1 = arith.constant 0 : i32
    return %c0_i32, %c0_i32_0 : i32, i32
  }
  func.func @transform_5(%arg0: i32) -> (i32, i32) {
    %c0_i32 = arith.constant 0 : i32
    %c0_i32_0 = arith.constant 0 : i32
    return %c0_i32, %arg0 : i32, i32
  }
}

</mosaic_0001>

<llo_original>
// kernel: tpu_custom_call.1
$region0: #{tpu_custom_call.1}
  #allocation0 [shape = 'u32[]', space=smem, size = 0x4, offset = 0x4, fixed_abs, tag = 'smem constant byte address 0x4 - core index']
  #allocation1 [shape = 'u32[144,128]{1,0:T(1,128)}', space=vmem, size = 0x12000, scoped, tag = 'internal scratch']
  #allocation2 [shape = 'f32[1,1]{1,0:T(1,128)S(6)}', space=smem, size = 0x200, scoped, tag = 'scoped memory for tpu_custom_call.1']
  %s0 = inlined_call_operand.<no memory space> [shape: f32[1,1], index: 0, kind: input, shape index: {}]
  %s1 = inlined_call_operand.vmem [shape: f32[5,128], index: 1, kind: input, shape index: {}]
  %s2 = inlined_call_operand.vmem [shape: f32[3,23,5], index: 2, kind: input, shape index: {}]
  %s3 = inlined_call_operand.vmem [shape: f32[3,23], index: 3, kind: input, shape index: {}]
  %s4 = inlined_call_operand.vmem [shape: f32[23,3], index: 4, kind: input, shape index: {}]
  %s5 = inlined_call_operand.hbm [shape: f32[3,128], index: 5, kind: output, shape index: {}]
  %s6 = sld [smem:[#allocation0]]
  $region30: #{tpu_custom_call.1} parent=0
    _
  %s8 = ssub.s32 1, %s6
  %s9 = scalar_select 0, %s8, %s6
  %10 = sst [smem:[#allocation2]] %s0
  $region1: #{tpu_custom_call.1} parent=0
    #allocation3 [shape = 'u8[2048]{0}', space=vmem, size = 0x800, scoped, tag = 'output window, operand 0, single buffered']
    #allocation4 [shape = 's32[1]{0}', space=sflag, size = 0x4, scoped, tag = 'scoped memory for tpu_custom_call.1']
    %11 = vsyncpa [#allocation4], 0
    // Predicated region
    $region2: #{tpu_custom_call.1} parent=1 // pred_check
      _
    $region3: #{tpu_custom_call.1} parent=1 // pred_check_branch
      %13 = sbr.rel (0) target = $region5
    $region4: #{tpu_custom_call.1} parent=1 // pred_region
      _
    $region5: #{tpu_custom_call.1} parent=1 // pred_fallthru
      _
    // Predicated region
    $region6: #{tpu_custom_call.1} parent=1 // pred_check
      _
    $region7: #{tpu_custom_call.1} parent=1 // pred_check_branch
      %15 = sbr.rel (0) target = $region9
    $region8: #{tpu_custom_call.1} parent=1 // pred_region
      _
    $region9: #{tpu_custom_call.1} parent=1 // pred_fallthru
      _
    // Predicated region
    $region10: #{tpu_custom_call.1} parent=1 // pred_check
      _
    $region11: #{tpu_custom_call.1} parent=1 // pred_check_branch
      %17 = sbr.rel (0) target = $region13
    $region12: #{tpu_custom_call.1} parent=1 // pred_region
      _
    $region13: #{tpu_custom_call.1} parent=1 // pred_fallthru
      _
    // Predicated region
    $region14: #{tpu_custom_call.1} parent=1 // pred_check
      _
    $region15: #{tpu_custom_call.1} parent=1 // pred_check_branch
      %19 = sbr.rel (0) target = $region17
    $region16: #{tpu_custom_call.1} parent=1 // pred_region
      _
    $region17: #{tpu_custom_call.1} parent=1 // pred_fallthru
      _
    // Predicated region
    $region18: #{tpu_custom_call.1} parent=1 // pred_check
      _
    $region19: #{tpu_custom_call.1} parent=1 // pred_check_branch
      %21 = sbr.rel (0) target = $region21
    $region20: #{tpu_custom_call.1} parent=1 // pred_region
      _
    $region21: #{tpu_custom_call.1} parent=1 // pred_fallthru
      _
    %v22 = vld [vmem:[%s1] sm:$0x1f]
    %v23 = vld [vmem:[%s2] sm:$0xff]
    %v24 = vld [vmem:[%s2 + $0x8] sm:$0xff]
    %v25 = vld [vmem:[%s2 + $0x10] sm:$0x7f]
    %vm26 = vcmask 39936
    %v28 = vsel %vm26, %v23, 0
    %v31 = vsel %vm26, %v24, 0
    %v34 = vsel %vm26, %v25, 0
    %vm36 = vcmask 1044480
    %v38 = vsel %vm36, %v22, 0
    %40 = vmatprep.subr.mxu0 0.0
    %41 = vmatpush1.msra.mxu0 %v38
    %42 = vmatprep.subr.mxu0 0.0
    %43 = vmatpush1.msra.mxu0 0.0
    %44 = vmatprep.subr.mxu0 0.0
    %45 = vmatpush1.msra.mxu0 0.0
    %46 = vmatprep.subr.mxu0 0.0
    %47 = vmatpush1.msra.mxu0 0.0
    %48 = vmatprep.subr.mxu0 0.0
    %49 = vmatpush1.msra.mxu0 0.0
    %50 = vmatprep.subr.mxu0 0.0
    %51 = vmatpush1.msra.mxu0 0.0
    %52 = vmatprep.subr.mxu0 0.0
    %53 = vmatpush1.msra.mxu0 0.0
    %54 = vmatprep.subr.mxu0 0.0
    %55 = vmatpush1.msra.mxu0 0.0
    %56 = vmatprep.subr.mxu0 0.0
    %57 = vmatpush1.msra.mxu0 0.0
    %58 = vmatprep.subr.mxu0 0.0
    %59 = vmatpush1.msra.mxu0 0.0
    %60 = vmatprep.subr.mxu0 0.0
    %61 = vmatpush1.msra.mxu0 0.0
    %62 = vmatprep.subr.mxu0 0.0
    %63 = vmatpush1.msra.mxu0 0.0
    %64 = vmatprep.subr.mxu0 0.0
    %65 = vmatpush1.msra.mxu0 0.0
    %66 = vmatprep.subr.mxu0 0.0
    %67 = vmatpush1.msra.mxu0 0.0
    %68 = vmatprep.subr.mxu0 0.0
    %69 = vmatpush1.msra.mxu0 0.0
    %70 = vmatprep.subr.mxu0 0.0
    %71 = vmatpush1.msra.mxu0 0.0
    %72 = vmatprep.subr.mxu0 0.0
    %73 = vmatpush1.msra.mxu0 0.0
    %74 = vmatprep.subr.mxu0 0.0
    %75 = vmatpush1.msra.mxu0 0.0
    %76 = vmatprep.subr.mxu0 0.0
    %77 = vmatpush1.msra.mxu0 0.0
    %78 = vmatprep.subr.mxu0 0.0
    %79 = vmatpush1.msra.mxu0 0.0
    %80 = vmatprep.subr.mxu0 0.0
    %81 = vmatpush1.msra.mxu0 0.0
    %82 = vmatprep.subr.mxu0 0.0
    %83 = vmatpush1.msra.mxu0 0.0
    %84 = vmatprep.subr.mxu0 0.0
    %85 = vmatpush1.msra.mxu0 0.0
    %86 = vmatprep.subr.mxu0 0.0
    %87 = vmatpush1.msra.mxu0 0.0
    %88 = vmatprep.subr.mxu0 0.0
    %89 = vmatpush1.msra.mxu0 0.0
    %90 = vmatprep.subr.mxu0 0.0
    %91 = vmatpush1.msra.mxu0 0.0
    %92 = vmatprep.subr.mxu0 0.0
    %93 = vmatpush1.msra.mxu0 0.0
    %94 = vmatprep.subr.mxu0 0.0
    %95 = vmatpush1.msra.mxu0 0.0
    %96 = vmatprep.subr.mxu0 0.0
    %97 = vmatpush1.msra.mxu0 0.0
    %98 = vmatprep.subr.mxu0 0.0
    %99 = vmatpush1.msra.mxu0 0.0
    %100 = vmatprep.subr.mxu0 0.0
    %101 = vmatpush1.msra.mxu0 0.0
    %102 = vmatprep.subr.mxu0 0.0
    %103 = vmatpush1.msra.mxu0 0.0
    %104 = vmatprep.mubr.f32.mxu0 0.0
    %105 = vmatmul.mubr.f32.gmra.mrb[0].mxu0 %v28
    %v106 = vpop.f32.mrb[0].mxu0
    %v107 = vadd.f32 0.0, %v106
    %v108 = vpop.f32.mrb[0].mxu0
    %109 = vmatprep.mubr.f32.mxu0 0.0
    %110 = vmatmul.mubr.f32.gmra.mrb[0].mxu0 %v31
    %v111 = vpop.f32.mrb[0].mxu0
    %v112 = vadd.f32 0.0, %v111
    %v113 = vpop.f32.mrb[0].mxu0
    %114 = vmatprep.mubr.f32.mxu0 0.0
    %115 = vmatmul.mubr.f32.gmra.mrb[0].mxu0 %v34
    %v116 = vpop.f32.mrb[0].mxu0
    %v117 = vadd.f32 0.0, %v116
    %v118 = vpop.f32.mrb[0].mxu0
    %119 = vdwg.mxu0
    %s120 = scalar_lea.vmem %s2, 24
    %v121 = vld [vmem:[%s120] sm:$0xff]
    %v122 = vld [vmem:[%s120 + $0x8] sm:$0xff]
    %v123 = vld [vmem:[%s120 + $0x10] sm:$0x7f]
    %v125 = vsel %vm26, %v121, 0
    %v128 = vsel %vm26, %v122, 0
    %v131 = vsel %vm26, %v123, 0
    %133 = vmatprep.subr.mxu0 0.0
    %134 = vmatpush1.msra.mxu0 %v38
    %135 = vmatprep.subr.mxu0 0.0
    %136 = vmatpush1.msra.mxu0 0.0
    %137 = vmatprep.subr.mxu0 0.0
    %138 = vmatpush1.msra.mxu0 0.0
    %139 = vmatprep.subr.mxu0 0.0
    %140 = vmatpush1.msra.mxu0 0.0
    %141 = vmatprep.subr.mxu0 0.0
    %142 = vmatpush1.msra.mxu0 0.0
    %143 = vmatprep.subr.mxu0 0.0
    %144 = vmatpush1.msra.mxu0 0.0
    %145 = vmatprep.subr.mxu0 0.0
    %146 = vmatpush1.msra.mxu0 0.0
    %147 = vmatprep.subr.mxu0 0.0
    %148 = vmatpush1.msra.mxu0 0.0
    %149 = vmatprep.subr.mxu0 0.0
    %150 = vmatpush1.msra.mxu0 0.0
    %151 = vmatprep.subr.mxu0 0.0
    %152 = vmatpush1.msra.mxu0 0.0
    %153 = vmatprep.subr.mxu0 0.0
    %154 = vmatpush1.msra.mxu0 0.0
    %155 = vmatprep.subr.mxu0 0.0
    %156 = vmatpush1.msra.mxu0 0.0
    %157 = vmatprep.subr.mxu0 0.0
    %158 = vmatpush1.msra.mxu0 0.0
    %159 = vmatprep.subr.mxu0 0.0
    %160 = vmatpush1.msra.mxu0 0.0
    %161 = vmatprep.subr.mxu0 0.0
    %162 = vmatpush1.msra.mxu0 0.0
    %163 = vmatprep.subr.mxu0 0.0
    %164 = vmatpush1.msra.mxu0 0.0
    %165 = vmatprep.subr.mxu0 0.0
    %166 = vmatpush1.msra.mxu0 0.0
    %167 = vmatprep.subr.mxu0 0.0
    %168 = vmatpush1.msra.mxu0 0.0
    %169 = vmatprep.subr.mxu0 0.0
    %170 = vmatpush1.msra.mxu0 0.0
    %171 = vmatprep.subr.mxu0 0.0
    %172 = vmatpush1.msra.mxu0 0.0
    %173 = vmatprep.subr.mxu0 0.0
    %174 = vmatpush1.msra.mxu0 0.0
    %175 = vmatprep.subr.mxu0 0.0
    %176 = vmatpush1.msra.mxu0 0.0
    %177 = vmatprep.subr.mxu0 0.0
    %178 = vmatpush1.msra.mxu0 0.0
    %179 = vmatprep.subr.mxu0 0.0
    %180 = vmatpush1.msra.mxu0 0.0
    %181 = vmatprep.subr.mxu0 0.0
    %182 = vmatpush1.msra.mxu0 0.0
    %183 = vmatprep.subr.mxu0 0.0
    %184 = vmatpush1.msra.mxu0 0.0
    %185 = vmatprep.subr.mxu0 0.0
    %186 = vmatpush1.msra.mxu0 0.0
    %187 = vmatprep.subr.mxu0 0.0
    %188 = vmatpush1.msra.mxu0 0.0
    %189 = vmatprep.subr.mxu0 0.0
    %190 = vmatpush1.msra.mxu0 0.0
    %191 = vmatprep.subr.mxu0 0.0
    %192 = vmatpush1.msra.mxu0 0.0
    %193 = vmatprep.subr.mxu0 0.0
    %194 = vmatpush1.msra.mxu0 0.0
    %195 = vmatprep.subr.mxu0 0.0
    %196 = vmatpush1.msra.mxu0 0.0
    %197 = vmatprep.mubr.f32.mxu0 0.0
    %198 = vmatmul.mubr.f32.gmra.mrb[0].mxu0 %v125
    %v199 = vpop.f32.mrb[0].mxu0
    %v200 = vadd.f32 0.0, %v199
    %v201 = vpop.f32.mrb[0].mxu0
    %202 = vmatprep.mubr.f32.mxu0 0.0
    %203 = vmatmul.mubr.f32.gmra.mrb[0].mxu0 %v128
    %v204 = vpop.f32.mrb[0].mxu0
    %v205 = vadd.f32 0.0, %v204
    %v206 = vpop.f32.mrb[0].mxu0
    %207 = vmatprep.mubr.f32.mxu0 0.0
    %208 = vmatmul.mubr.f32.gmra.mrb[0].mxu0 %v131
    %v209 = vpop.f32.mrb[0].mxu0
    %v210 = vadd.f32 0.0, %v209
    %v211 = vpop.f32.mrb[0].mxu0
    %212 = vdwg.mxu0
    %v213 = vmul.f32 %v107, %v200
    %v214 = vmul.f32 %v112, %v205
    %v215 = vmul.f32 %v117, %v210
    %s216 = scalar_lea.vmem %s2, 48
    %v217 = vld [vmem:[%s216] sm:$0xff]
    %v218 = vld [vmem:[%s216 + $0x8] sm:$0xff]
    %v219 = vld [vmem:[%s216 + $0x10] sm:$0x7f]
    %v221 = vsel %vm26, %v217, 0
    %v224 = vsel %vm26, %v218, 0
    %v227 = vsel %vm26, %v219, 0
    %229 = vmatprep.subr.mxu0 0.0
    %230 = vmatpush1.msra.mxu0 %v38
    %231 = vmatprep.subr.mxu0 0.0
    %232 = vmatpush1.msra.mxu0 0.0
    %233 = vmatprep.subr.mxu0 0.0
    %234 = vmatpush1.msra.mxu0 0.0
    %235 = vmatprep.subr.mxu0 0.0
    %236 = vmatpush1.msra.mxu0 0.0
    %237 = vmatprep.subr.mxu0 0.0
    %238 = vmatpush1.msra.mxu0 0.0
    %239 = vmatprep.subr.mxu0 0.0
    %240 = vmatpush1.msra.mxu0 0.0
    %241 = vmatprep.subr.mxu0 0.0
    %242 = vmatpush1.msra.mxu0 0.0
    %243 = vmatprep.subr.mxu0 0.0
    %244 = vmatpush1.msra.mxu0 0.0
    %245 = vmatprep.subr.mxu0 0.0
    %246 = vmatpush1.msra.mxu0 0.0
    %247 = vmatprep.subr.mxu0 0.0
    %248 = vmatpush1.msra.mxu0 0.0
    %249 = vmatprep.subr.mxu0 0.0
    %250 = vmatpush1.msra.mxu0 0.0
    %251 = vmatprep.subr.mxu0 0.0
    %252 = vmatpush1.msra.mxu0 0.0
    %253 = vmatprep.subr.mxu0 0.0
    %254 = vmatpush1.msra.mxu0 0.0
    %255 = vmatprep.subr.mxu0 0.0
    %256 = vmatpush1.msra.mxu0 0.0
    %257 = vmatprep.subr.mxu0 0.0
    %258 = vmatpush1.msra.mxu0 0.0
    %259 = vmatprep.subr.mxu0 0.0
    %260 = vmatpush1.msra.mxu0 0.0
    %261 = vmatprep.subr.mxu0 0.0
    %262 = vmatpush1.msra.mxu0 0.0
    %263 = vmatprep.subr.mxu0 0.0
    %264 = vmatpush1.msra.mxu0 0.0
    %265 = vmatprep.subr.mxu0 0.0
    %266 = vmatpush1.msra.mxu0 0.0
    %267 = vmatprep.subr.mxu0 0.0
    %268 = vmatpush1.msra.mxu0 0.0
    %269 = vmatprep.subr.mxu0 0.0
    %270 = vmatpush1.msra.mxu0 0.0
    %271 = vmatprep.subr.mxu0 0.0
    %272 = vmatpush1.msra.mxu0 0.0
    %273 = vmatprep.subr.mxu0 0.0
    %274 = vmatpush1.msra.mxu0 0.0
    %275 = vmatprep.subr.mxu0 0.0
    %276 = vmatpush1.msra.mxu0 0.0
    %277 = vmatprep.subr.mxu0 0.0
    %278 = vmatpush1.msra.mxu0 0.0
    %279 = vmatprep.subr.mxu0 0.0
    %280 = vmatpush1.msra.mxu0 0.0
    %281 = vmatprep.subr.mxu0 0.0
    %282 = vmatpush1.msra.mxu0 0.0
    %283 = vmatprep.subr.mxu0 0.0
    %284 = vmatpush1.msra.mxu0 0.0
    %285 = vmatprep.subr.mxu0 0.0
    %286 = vmatpush1.msra.mxu0 0.0
    %287 = vmatprep.subr.mxu0 0.0
    %288 = vmatpush1.msra.mxu0 0.0
    %289 = vmatprep.subr.mxu0 0.0
    %290 = vmatpush1.msra.mxu0 0.0
    %291 = vmatprep.subr.mxu0 0.0
    %292 = vmatpush1.msra.mxu0 0.0
    %293 = vmatprep.mubr.f32.mxu0 0.0
    %294 = vmatmul.mubr.f32.gmra.mrb[0].mxu0 %v221
    %v295 = vpop.f32.mrb[0].mxu0
    %v296 = vadd.f32 0.0, %v295
    %v297 = vpop.f32.mrb[0].mxu0
    %298 = vmatprep.mubr.f32.mxu0 0.0
    %299 = vmatmul.mubr.f32.gmra.mrb[0].mxu0 %v224
    %v300 = vpop.f32.mrb[0].mxu0
    %v301 = vadd.f32 0.0, %v300
    %v302 = vpop.f32.mrb[0].mxu0
    %303 = vmatprep.mubr.f32.mxu0 0.0
    %304 = vmatmul.mubr.f32.gmra.mrb[0].mxu0 %v227
    %v305 = vpop.f32.mrb[0].mxu0
    %v306 = vadd.f32 0.0, %v305
    %v307 = vpop.f32.mrb[0].mxu0
    %308 = vdwg.mxu0
    %v309 = vmul.f32 %v213, %v296
    %v310 = vmul.f32 %v214, %v301
    %v311 = vmul.f32 %v215, %v306
    %v312 = vld [vmem:[%s4] sm:$0xff]
    %v313 = vld [vmem:[%s4 + $0x8] sm:$0xff]
    %v314 = vld [vmem:[%s4 + $0x10] sm:$0x7f]
    %v315 = vand.u32 2147483647, %v22
    %vm316 = vcmp.le.f32.partialorder %v315, 0.7853982
    %vm317 = vcmp.lt.s32.totalorder %v22, 0
    %v318 = vand.u32 %v22, 2139095040
    %v319 = vshrl.u32 %v318, 23
    %v320 = vsub.s32 %v319, 127
    %v321 = vand.u32 2147483647, %v22
    %v322 = vand.u32 %v321, 8388607
    %v323 = vor.u32 %v322, 8388608
    %v324 = vsub.s32 0, %v323
    %v325 = vadd.s32 %v320, 1
    %vm326 = vcmp.gt.s32.totalorder %v325, 0
    %v327 = vsel %vm326, %v325, 0
    %v328 = vshrl.u32 %v327, 5
    %v329 = vand.u32 %v327, 31
    %v330 = vsub.s32 32, %v329
    %v331 = vshrl.u32 683565275, %v330
    %v332 = vshll.u32 683565275, %v329
    %v333 = vshrl.u32 2475754826, %v330
    %v334 = vor.u32 %v332, %v333
    %v335 = vshll.u32 2475754826, %v329
    %v336 = vshrl.u32 2131351028, %v330
    %v337 = vor.u32 %v335, %v336
    %v338 = vshll.u32 2131351028, %v329
    %v339 = vshrl.u32 2102212464, %v330
    %v340 = vor.u32 %v338, %v339
    %v341 = vshll.u32 2102212464, %v329
    %v342 = vshrl.u32 920167782, %v330
    %v343 = vor.u32 %v341, %v342
    %v344 = vshll.u32 920167782, %v329
    %v345 = vshrl.u32 1326507024, %v330
    %v346 = vor.u32 %v344, %v345
    %vm347 = vcmp.lt.s32.totalorder %v328, 1
    %vm348 = vcmp.lt.s32.totalorder %v328, 2
    %vm349 = vcmp.lt.s32.totalorder %v328, 3
    %vm350 = vcmp.lt.s32.totalorder %v328, 4
    %v351 = vsel %vm347, %v331, %v334
    %v352 = vsel %vm350, %v340, 2102212464
    %v353 = vsel %vm349, %v337, %v352
    %v354 = vsel %vm348, %v351, %v353
    %v355 = vsel %vm347, %v334, %v337
    %v356 = vsel %vm350, %v343, 920167782
    %v357 = vsel %vm349, %v340, %v356
    %v358 = vsel %vm348, %v355, %v357
    %v359 = vsel %vm347, %v337, %v340
    %v360 = vsel %vm350, %v346, 1326507024
    %v361 = vsel %vm349, %v343, %v360
    %v362 = vsel %vm348, %v359, %v361
    %v363 = vshll.u32 %v323, 8
    %v364 = vmul.u32.u64.compose %v363, %v362
    %v365 = vextract.low.u32 %v364
    %v366 = vextract.high.u32 %v364
    %v367 = vmul.u32.u64.compose %v363, %v358
    %v368 = vextract.low.u32 %v367
    %v369 = vextract.high.u32 %v367
    %v370 = vmul.u32 %v363, %v354
    %v371 = vadd.s32 %v366, %v368
    %vm372 = vc.u32 %v366, %v368
    %v373 = vadd.s32 %v369, 1
    %v374 = vsel %vm372, %v373, %v369
    %v375 = vadd.s32 %v370, %v374
    %v376 = vadd.s32 %v375, 536870912
    %v377 = vshrl.u32 %v376, 30
    %v378 = vshll.u32 %v377, 30
    %v379 = vsub.s32 %v375, %v378
    %vm380 = vcmp.lt.s32.totalorder %v379, 0
    %v381 = vsub.s32 0, %v379
    %v382 = vsel %vm380, %v381, %v379
    %v383 = vclz %v382
    %v384 = vsub.s32 %v383, 2
    %vm385 = vcmp.gt.s32.totalorder 0, %v384
    %v386 = vsel %vm385, 0, %v384
    %v387 = vsub.s32 32, %v386
    %v388 = vshll.u32 %v379, %v386
    %v389 = vshrl.u32 %v371, %v387
    %v390 = vor.u32 %v388, %v389
    %v391 = vsub.s32 4294967266, %v386
    %v392 = vadd.s32 %v391, 127
    %v393 = vshll.u32 %v392, 23
    %v394 = vor.u32 4788187, %v393
    %v395 = vand.u32 2147483647, %v394
    %v397 = vcvt.s32.f32 %v390
    %v398 = vmul.f32 %v397, %v395
    %v399 = vxor.u32 %v398, 2147483648
    %v400 = vsel %vm317, %v399, %v398
    %v401 = vsub.s32 4, %v377
    %v402 = vsel %vm317, %v401, %v377
    %v403 = vsel %vm316, %v22, %v400
    %v404 = vsel %vm316, 0, %v402
    %v405 = vcosq.f32.pop %v403
    %v406 = vsinq.f32.pop %v403
    %vm407 = vweird.f32 %v22
    %v408 = vadd.s32 %v404, 3
    %v409 = vand.u32 %v408, 3
    %vm410 = vcmp.lt.s32.totalorder %v409, 2
    %vm411 = vcmp.eq.s32.totalorder %v409, 0
    %v412 = vxor.u32 %v406, 2147483648
    %v413 = vsel %vm411, %v405, %v412
    %vm414 = vcmp.eq.s32.totalorder %v409, 2
    %v415 = vxor.u32 %v405, 2147483648
    %v416 = vsel %vm414, %v415, %v406
    %v417 = vsel %vm410, %v413, %v416
    %v418 = vsel %vm407, nan, %v417
    %vm419 = vcmask 23552
    %v421 = vsel %vm419, %v312, 0
    %v424 = vsel %vm419, %v313, 0
    %v427 = vsel %vm419, %v314, 0
    %vm429 = vcmask 1042432
    %v431 = vsel %vm429, %v418, 0
    %433 = vmatprep.subr.mxu0 0.0
    %434 = vmatpush1.msra.mxu0 %v431
    %435 = vmatprep.subr.mxu0 0.0
    %436 = vmatpush1.msra.mxu0 0.0
    %437 = vmatprep.subr.mxu0 0.0
    %438 = vmatpush1.msra.mxu0 0.0
    %439 = vmatprep.subr.mxu0 0.0
    %440 = vmatpush1.msra.mxu0 0.0
    %441 = vmatprep.subr.mxu0 0.0
    %442 = vmatpush1.msra.mxu0 0.0
    %443 = vmatprep.subr.mxu0 0.0
    %444 = vmatpush1.msra.mxu0 0.0
    %445 = vmatprep.subr.mxu0 0.0
    %446 = vmatpush1.msra.mxu0 0.0
    %447 = vmatprep.subr.mxu0 0.0
    %448 = vmatpush1.msra.mxu0 0.0
    %449 = vmatprep.subr.mxu0 0.0
    %450 = vmatpush1.msra.mxu0 0.0
    %451 = vmatprep.subr.mxu0 0.0
    %452 = vmatpush1.msra.mxu0 0.0
    %453 = vmatprep.subr.mxu0 0.0
    %454 = vmatpush1.msra.mxu0 0.0
    %455 = vmatprep.subr.mxu0 0.0
    %456 = vmatpush1.msra.mxu0 0.0
    %457 = vmatprep.subr.mxu0 0.0
    %458 = vmatpush1.msra.mxu0 0.0
    %459 = vmatprep.subr.mxu0 0.0
    %460 = vmatpush1.msra.mxu0 0.0
    %461 = vmatprep.subr.mxu0 0.0
    %462 = vmatpush1.msra.mxu0 0.0
    %463 = vmatprep.subr.mxu0 0.0
    %464 = vmatpush1.msra.mxu0 0.0
    %465 = vmatprep.subr.mxu0 0.0
    %466 = vmatpush1.msra.mxu0 0.0
    %467 = vmatprep.subr.mxu0 0.0
    %468 = vmatpush1.msra.mxu0 0.0
    %469 = vmatprep.subr.mxu0 0.0
    %470 = vmatpush1.msra.mxu0 0.0
    %471 = vmatprep.subr.mxu0 0.0
    %472 = vmatpush1.msra.mxu0 0.0
    %473 = vmatprep.subr.mxu0 0.0
    %474 = vmatpush1.msra.mxu0 0.0
    %475 = vmatprep.subr.mxu0 0.0
    %476 = vmatpush1.msra.mxu0 0.0
    %477 = vmatprep.subr.mxu0 0.0
    %478 = vmatpush1.msra.mxu0 0.0
    %479 = vmatprep.subr.mxu0 0.0
    %480 = vmatpush1.msra.mxu0 0.0
    %481 = vmatprep.subr.mxu0 0.0
    %482 = vmatpush1.msra.mxu0 0.0
    %483 = vmatprep.subr.mxu0 0.0
    %484 = vmatpush1.msra.mxu0 0.0
    %485 = vmatprep.subr.mxu0 0.0
    %486 = vmatpush1.msra.mxu0 0.0
    %487 = vmatprep.subr.mxu0 0.0
    %488 = vmatpush1.msra.mxu0 0.0
    %489 = vmatprep.subr.mxu0 0.0
    %490 = vmatpush1.msra.mxu0 0.0
    %491 = vmatprep.subr.mxu0 0.0
    %492 = vmatpush1.msra.mxu0 0.0
    %493 = vmatprep.subr.mxu0 0.0
    %494 = vmatpush1.msra.mxu0 0.0
    %495 = vmatprep.subr.mxu0 0.0
    %496 = vmatpush1.msra.mxu0 0.0
    %497 = vmatprep.mubr.f32.mxu0 0.0
    %498 = vmatmul.mubr.f32.gmra.mrb[0].mxu0 %v421
    %v499 = vpop.f32.mrb[0].mxu0
    %v500 = vadd.f32 0.0, %v499
    %v501 = vpop.f32.mrb[0].mxu0
    %502 = vmatprep.mubr.f32.mxu0 0.0
    %503 = vmatmul.mubr.f32.gmra.mrb[0].mxu0 %v424
    %v504 = vpop.f32.mrb[0].mxu0
    %v505 = vadd.f32 0.0, %v504
    %v506 = vpop.f32.mrb[0].mxu0
    %507 = vmatprep.mubr.f32.mxu0 0.0
    %508 = vmatmul.mubr.f32.gmra.mrb[0].mxu0 %v427
    %v509 = vpop.f32.mrb[0].mxu0
    %v510 = vadd.f32 0.0, %v509
    %v511 = vpop.f32.mrb[0].mxu0
    %512 = vdwg.mxu0
    %v513 = vadd.f32 %v309, %v500
    %v514 = vadd.f32 %v310, %v505
    %v515 = vadd.f32 %v311, %v510
    %v516 = vld [vmem:[%s3] sm:$0x7]
    %vm517 = vcmask 187392
    %v519 = vsel %vm517, %v516, 0
    %vm521 = vcmask 1046528
    %v523 = vsel %vm521, %v515, 0
    %525 = vmatprep.subr.mxu0 0.0
    %526 = vmatpush1.msra.mxu0 %v513
    %527 = vmatprep.subr.mxu0 0.0
    %528 = vmatpush1.msra.mxu0 %v514
    %529 = vmatprep.subr.mxu0 0.0
    %530 = vmatpush1.msra.mxu0 %v523
    %531 = vmatprep.subr.mxu0 0.0
    %532 = vmatpush1.msra.mxu0 0.0
    %533 = vmatprep.subr.mxu0 0.0
    %534 = vmatpush1.msra.mxu0 0.0
    %535 = vmatprep.subr.mxu0 0.0
    %536 = vmatpush1.msra.mxu0 0.0
    %537 = vmatprep.subr.mxu0 0.0
    %538 = vmatpush1.msra.mxu0 0.0
    %539 = vmatprep.subr.mxu0 0.0
    %540 = vmatpush1.msra.mxu0 0.0
    %541 = vmatprep.subr.mxu0 0.0
    %542 = vmatpush1.msra.mxu0 0.0
    %543 = vmatprep.subr.mxu0 0.0
    %544 = vmatpush1.msra.mxu0 0.0
    %545 = vmatprep.subr.mxu0 0.0
    %546 = vmatpush1.msra.mxu0 0.0
    %547 = vmatprep.subr.mxu0 0.0
    %548 = vmatpush1.msra.mxu0 0.0
    %549 = vmatprep.subr.mxu0 0.0
    %550 = vmatpush1.msra.mxu0 0.0
    %551 = vmatprep.subr.mxu0 0.0
    %552 = vmatpush1.msra.mxu0 0.0
    %553 = vmatprep.subr.mxu0 0.0
    %554 = vmatpush1.msra.mxu0 0.0
    %555 = vmatprep.subr.mxu0 0.0
    %556 = vmatpush1.msra.mxu0 0.0
    %557 = vmatprep.subr.mxu0 0.0
    %558 = vmatpush1.msra.mxu0 0.0
    %559 = vmatprep.subr.mxu0 0.0
    %560 = vmatpush1.msra.mxu0 0.0
    %561 = vmatprep.subr.mxu0 0.0
    %562 = vmatpush1.msra.mxu0 0.0
    %563 = vmatprep.subr.mxu0 0.0
    %564 = vmatpush1.msra.mxu0 0.0
    %565 = vmatprep.subr.mxu0 0.0
    %566 = vmatpush1.msra.mxu0 0.0
    %567 = vmatprep.subr.mxu0 0.0
    %568 = vmatpush1.msra.mxu0 0.0
    %569 = vmatprep.subr.mxu0 0.0
    %570 = vmatpush1.msra.mxu0 0.0
    %571 = vmatprep.subr.mxu0 0.0
    %572 = vmatpush1.msra.mxu0 0.0
    %573 = vmatprep.subr.mxu0 0.0
    %574 = vmatpush1.msra.mxu0 0.0
    %575 = vmatprep.subr.mxu0 0.0
    %576 = vmatpush1.msra.mxu0 0.0
    %577 = vmatprep.subr.mxu0 0.0
    %578 = vmatpush1.msra.mxu0 0.0
    %579 = vmatprep.subr.mxu0 0.0
    %580 = vmatpush1.msra.mxu0 0.0
    %581 = vmatprep.subr.mxu0 0.0
    %582 = vmatpush1.msra.mxu0 0.0
    %583 = vmatprep.subr.mxu0 0.0
    %584 = vmatpush1.msra.mxu0 0.0
    %585 = vmatprep.subr.mxu0 0.0
    %586 = vmatpush1.msra.mxu0 0.0
    %587 = vmatprep.subr.mxu0 0.0
    %588 = vmatpush1.msra.mxu0 0.0
    %589 = vmatprep.mubr.f32.mxu0 0.0
    %590 = vmatmul.mubr.f32.gmra.mrb[0].mxu0 %v519
    %v591 = vpop.f32.mrb[0].mxu0
    %v592 = vadd.f32 0.0, %v591
    %v593 = vpop.f32.mrb[0].mxu0
    %594 = vdwg.mxu0
    %s595 = sld [smem:[#allocation2]]
    %v596 = vstv %s595
    %v597 = vmul.f32 %v592, %v596
    %v598 = vadd.f32 %v22, %v597
    %599 = vst [vmem:[#allocation3] sm:$0x7] %v598
    // Predicated region
    $region22: #{tpu_custom_call.1} parent=1 // pred_check
      _
    $region23: #{tpu_custom_call.1} parent=1 // pred_check_branch
      %601 = sbr.rel (0) target = $region25
    $region24: #{tpu_custom_call.1} parent=1 // pred_region
      %s603 = ssub.s32 64, 64
      %604 = vsyncadd [#allocation4], %s603
      %s606 = sshll.u32 [#allocation3], 4
      %s607 = int_to_ptr.vmem [resolvable:$true] %s606
      %609 = dma.vmem_to_hbm [thread:$0]  %s607, 64, %s5, [#allocation4]
    $region25: #{tpu_custom_call.1} parent=1 // pred_fallthru
      _
    // Predicated region
    $region26: #{tpu_custom_call.1} parent=1 // pred_check
      _
    $region27: #{tpu_custom_call.1} parent=1 // pred_check_branch
      %611 = sbr.rel (0) target = $region29
    $region28: #{tpu_custom_call.1} parent=1 // pred_region
      %612 = dma.done [#allocation4], 64
    $region29: #{tpu_custom_call.1} parent=1 // pred_fallthru
      _
    %613 = vsyncpa [#allocation4], 1

</llo_original>
